<compile_context>
chip_gen: v7x
topology: tpu7x:2x2x1
jax: 0.10.0
libtpu: 0.0.40
codegen_flags: <defaults>
</compile_context>

<pallas_src>
import functools

import jax
import jax.numpy as jnp
from jax.experimental import pallas as pl
from jax.experimental.pallas import tpu as pltpu


def _cep_kernel(frames_ref, code_ref, noise_ref, sigma_ref, noisy_ref, blur_ref,
                *, frame_n, ce_code_n, n_cam, C, bt):
    """One (H-tile, batch-tile) grid step.

    frames_ref: (bt, F, C, TH, W)                 frames block
    code_ref:   (n_cam, ce_code_n, C, TH, W)      binarized code (bf16, {0,1})
    noise_ref:  (bt, 2*n_cam*C, TH, W)            unit Gaussian noise block
    sigma_ref:  (1,) f32 in SMEM                  noise level
    noisy_ref / blur_ref: (bt, 2*n_cam*C, TH, W)  outputs
    """
    up = frame_n // ce_code_n
    inv = jnp.float32(1.0 / frame_n)
    out_dt = blur_ref.dtype
    sigma = sigma_ref[0]

    for b in range(bt):
        # Stream the per-code-frame partial sums: consume g_i immediately so
        # only (n_cam + 2) f32 (C, TH, W) slabs stay live.
        total = None
        accs = [None] * n_cam
        for i in range(ce_code_n):
            blk = frames_ref[b, i * up:(i + 1) * up].astype(jnp.float32)
            gi = jnp.sum(blk, axis=0) if up > 1 else blk[0]       # (C, TH, W)
            total = gi if total is None else total + gi
            for k in range(n_cam):
                ck = code_ref[k, i].astype(jnp.float32)
                accs[k] = ck * gi if accs[k] is None else accs[k] + ck * gi
        total = total * inv                      # mean over all frames

        for k in range(n_cam):
            s_on = accs[k] * inv                 # sum(c * f) / F
            s_off = total - s_on                 # sum((1 - c) * f) / F
            lo = 2 * k * C
            mid = lo + C
            hi = mid + C
            blur_ref[b, lo:mid] = s_on.astype(out_dt)
            blur_ref[b, mid:hi] = s_off.astype(out_dt)
            noisy_ref[b, lo:mid] = (
                s_on + sigma * noise_ref[b, lo:mid].astype(jnp.float32)
            ).astype(out_dt)
            noisy_ref[b, mid:hi] = (
                s_off + sigma * noise_ref[b, mid:hi].astype(jnp.float32)
            ).astype(out_dt)


def _vmem_budget():
    """Per-generation VMEM limit + tile budget (v7x-safe fallback)."""
    try:
        cap = pltpu.get_tpu_info().vmem_capacity_bytes
    except Exception:
        cap = 64 * 1024 * 1024          # v7x has the smallest VMEM per core
    limit = min(int(cap * 0.75), 100 * 1024 * 1024)
    budget = int(limit * 0.85)
    return limit, budget


def _divisors_desc(n):
    return [d for d in range(n, 0, -1) if n % d == 0]


def _choose_tiles(B, F, C, H, W, n_cam, ce_code_n, in_bytes, out_bytes, budget):
    """Pick (batch tile, H tile) so double-buffered blocks fit the budget."""
    def footprint(bt, th):
        frames = bt * F * C * th * W * in_bytes
        code = n_cam * ce_code_n * C * th * W * 2           # bf16 code
        noise = bt * 2 * n_cam * C * th * W * in_bytes
        outs = 2 * bt * 2 * n_cam * C * th * W * out_bytes
        live = (n_cam + 3) * C * th * W * 4                 # f32 accumulators
        return 2 * (frames + code + noise + outs) + live    # double-buffered

    h_cands = [H] + [d for d in _divisors_desc(H) if d != H and d % 8 == 0]
    b_cands = _divisors_desc(B)
    bt, th = 1, h_cands[-1]
    found = False
    for th_c in h_cands:
        for bt_c in b_cands:
            if footprint(bt_c, th_c) <= budget:
                bt, th = bt_c, th_c
                found = True
                break
        if found:
            break

    # Prefer >= 2 grid steps so both v7x TensorCores get work.
    if (H // th) * (B // bt) < 2 and bt > 1:
        bt = max(d for d in range(1, bt) if B % d == 0)
    return bt, th


def cep_blur_noisy(frames, code, noise, sigma, *, frame_n):
    """frames: (B, F, C, H, W); code: (n_cam, ce_code_n, C, H, W) binarized
    ({0,1}, narrow dtype OK); noise: (B, 2*n_cam*C, H, W) unit Gaussian;
    sigma: (1,) f32.

    Returns (noisy, blur), each (B, 2*n_cam*C, H, W) in frames.dtype, with the
    module's channel layout: per camera k, [2kC:(2k+1)C] = coded mean,
    [(2k+1)C:(2k+2)C] = complement mean.
    """
    B, F, C, H, W = frames.shape
    n_cam, ce_code_n = code.shape[0], code.shape[1]
    out_dt = frames.dtype
    out_sd = jax.ShapeDtypeStruct((B, 2 * n_cam * C, H, W), out_dt)

    vmem_limit, budget = _vmem_budget()
    bt, th = _choose_tiles(B, F, C, H, W, n_cam, ce_code_n,
                           jnp.dtype(frames.dtype).itemsize,
                           jnp.dtype(out_dt).itemsize, budget)
    nh, nb = H // th, B // bt

    kernel = functools.partial(
        _cep_kernel, frame_n=frame_n, ce_code_n=ce_code_n,
        n_cam=n_cam, C=C, bt=bt)

    noisy, blur = pl.pallas_call(
        kernel,
        out_shape=(out_sd, out_sd),
        grid_spec=pltpu.PrefetchScalarGridSpec(
            num_scalar_prefetch=0,
            # batch innermost -> the code block index is constant across it,
            # so the code tile stays VMEM-resident over all batch steps.
            grid=(nh, nb),
            in_specs=[
                pl.BlockSpec((bt, F, C, th, W),
                             lambda h, b: (b, 0, 0, h, 0)),
                pl.BlockSpec((n_cam, ce_code_n, C, th, W),
                             lambda h, b: (0, 0, 0, h, 0)),
                pl.BlockSpec((bt, 2 * n_cam * C, th, W),
                             lambda h, b: (b, 0, h, 0)),
                pl.BlockSpec(memory_space=pltpu.MemorySpace.SMEM),
            ],
            out_specs=(
                pl.BlockSpec((bt, 2 * n_cam * C, th, W),
                             lambda h, b: (b, 0, h, 0)),
                pl.BlockSpec((bt, 2 * n_cam * C, th, W),
                             lambda h, b: (b, 0, h, 0)),
            ),
        ),
        compiler_params=pltpu.CompilerParams(
            dimension_semantics=("parallel", "parallel"),
            vmem_limit_bytes=vmem_limit,
        ),
    )(frames, code, noise, sigma)
    return noisy, blur


class CepEnc:
    """JAX port of cep_enc (forward only)."""

    def __init__(self, key, sigma_range=(0.0, 1e-9), ce_code_n=8, frame_n=8,
                 patch_size=(16, 128), in_channels=3, n_cam=2):
        self.sigma_range = sigma_range
        self.frame_n = frame_n
        self.ce_code_n = ce_code_n
        self.upsample_factor = frame_n // ce_code_n
        self.in_channels = in_channels
        self.patch_size = tuple(patch_size)
        self.n_cam = n_cam
        # nn.init.uniform_(a=-1, b=1), deterministic via PRNGKey
        self.ce_weight = jax.random.uniform(
            key, (ce_code_n, in_channels, *patch_size, n_cam),
            minval=-1.0, maxval=1.0, dtype=jnp.float32)

    def __call__(self, frames, noise_key):
        H, W = self.patch_size
        frames = frames[..., :H, :W]
        B, _, C = frames.shape[:3]

        # STE forward: (x > 0). Kernel copy at native ce_code_n temporal
        # resolution, one camera per leading block; {0,1} is exact in bf16.
        ce_code = self.ce_weight > 0                       # bool (N,C,H,W,n_cam)
        code_kernel = jnp.transpose(ce_code, (4, 0, 1, 2, 3)).astype(jnp.bfloat16)

        # noise_level ~ U(sigma_range); unit Gaussian drawn outside the kernel.
        # TODO(synk): the in-kernel HW PRNG (pltpu.prng_seed/stateful_normal)
        # would avoid materializing the noise in HBM, but it has no
        # interpret-mode lowering, so the noise is generated here and only the
        # `blur + sigma * noise` add is fused inside the Pallas kernel.
        k1, k2 = jax.random.split(noise_key)
        noise_level = jax.random.uniform(
            k1, (1,), minval=self.sigma_range[0], maxval=self.sigma_range[1],
            dtype=jnp.float32)
        noise = jax.random.normal(
            k2, (B, 2 * self.n_cam * C, H, W), dtype=frames.dtype)

        # Hot path + fused noise add in a single Pallas kernel.
        ce_blur_img_noisy, ce_blur_img = cep_blur_noisy(
            frames, code_kernel, noise, noise_level, frame_n=self.frame_n)

        # Upsampled code return value, matching the PyTorch module's layout.
        # TODO(synk): the batch broadcast materializes B copies in HBM; kept
        # only for API parity with the original module.
        ce_code_up = jnp.repeat(ce_code.astype(jnp.float32),
                                self.upsample_factor, axis=0)
        ce_code_up_ = jnp.broadcast_to(ce_code_up[None], (B, *ce_code_up.shape))

        return ce_blur_img_noisy, ce_code_up_, ce_blur_img


def _ref_blur(frames, ce_code_up, frame_n, n_cam, C):
    """Pure-JAX reference of the blurred image for correctness check."""
    B = frames.shape[0]
    H, W = frames.shape[-2:]
    out = jnp.zeros((B, 2 * n_cam * C, H, W), frames.dtype)
    for k in range(n_cam):
        code_k = ce_code_up[..., k][None]                       # (1,F,C,H,W)
        s1 = jnp.sum(code_k * frames, axis=1) / frame_n
        s0 = jnp.sum((1.0 - code_k) * frames, axis=1) / frame_n
        out = out.at[:, 2 * k * C:(2 * k + 1) * C].set(s1)
        out = out.at[:, (2 * k + 1) * C:(2 * k + 2) * C].set(s0)
    return out


if __name__ == "__main__":
    key = jax.random.PRNGKey(0)
    k_w, k_frames, k_noise = jax.random.split(key, 3)

    # ce_code_n < frame_n exercises the in-kernel temporal upsampling path.
    B, ce_code_n, frame_n, C, n_cam = 2, 4, 8, 3, 2
    H, W = 16, 128  # small patch, aligned to the (8,128) TPU tile

    model = CepEnc(k_w, ce_code_n=ce_code_n, frame_n=frame_n,
                   patch_size=(H, W), in_channels=C, n_cam=n_cam)

    frames = jax.random.uniform(k_frames, (B, frame_n, C, H, W),
                                dtype=jnp.float32)

    noisy, code_up, blur = model(frames, k_noise)
    jax.block_until_ready((noisy, code_up, blur))

    # Sanity check against a pure-JAX reference of the hot path.
    ce_code = (model.ce_weight > 0).astype(jnp.float32)
    ce_code_up = jnp.repeat(ce_code, model.upsample_factor, axis=0)
    ref = _ref_blur(frames, ce_code_up, frame_n, n_cam, C)
    assert blur.shape == (B, 2 * n_cam * C, H, W)
    assert noisy.shape == (B, 2 * n_cam * C, H, W)
    assert code_up.shape == (B, frame_n, C, H, W, n_cam)
    assert jnp.allclose(blur, ref, atol=1e-5, rtol=1e-5)
    # sigma <= 1e-9, so the fused noise must be a tiny perturbation of blur.
    assert float(jnp.max(jnp.abs(noisy - blur))) < 1e-5

    print("KERNEL_OK")
</pallas_src>

<mosaic_0001>
module attributes {stable_mosaic.version = 11 : i64} {
  func.func @_cep_kernel(%arg0: i32, %arg1: i32, %arg2: memref<1x8x3x16x128xf32, #tpu.memory_space<vmem>>, %arg3: memref<2x4x3x16x128xbf16, #tpu.memory_space<vmem>>, %arg4: memref<1x12x16x128xf32, #tpu.memory_space<vmem>>, %arg5: memref<1xf32, #tpu.memory_space<smem>>, %arg6: memref<1x12x16x128xf32, #tpu.memory_space<vmem>>, %arg7: memref<1x12x16x128xf32, #tpu.memory_space<vmem>>) attributes {dimension_semantics = [#tpu.dimension_semantics<parallel>, #tpu.dimension_semantics<parallel>], iteration_bounds = array<i64: 1, 2>, scalar_prefetch = 0 : i64, scratch_operands = 0 : i64, tpu.core_type = #tpu.core_type<tc>, window_params = [{transform_indices = @transform_0, window_bounds = array<i64: 1, 8, 3, 16, 128>}, {transform_indices = @transform_1, window_bounds = array<i64: 2, 4, 3, 16, 128>}, {transform_indices = @transform_2, window_bounds = array<i64: 1, 12, 16, 128>}, {transform_indices = @transform_3, window_bounds = array<i64: 1>}, {transform_indices = @transform_4, window_bounds = array<i64: 1, 12, 16, 128>}, {transform_indices = @transform_5, window_bounds = array<i64: 1, 12, 16, 128>}]} {
    %c0 = arith.constant 0 : index
    %0 = memref.load %arg5[%c0] : memref<1xf32, #tpu.memory_space<smem>>
    %c0_0 = arith.constant 0 : index
    %c0_1 = arith.constant 0 : index
    %c0_2 = arith.constant 0 : index
    %c0_3 = arith.constant 0 : index
    %c0_4 = arith.constant 0 : index
    %1 = vector.load %arg2[%c0_0, %c0_1, %c0_2, %c0_3, %c0_4] : memref<1x8x3x16x128xf32, #tpu.memory_space<vmem>>, vector<1x2x3x16x128xf32>
    %2 = vector.shape_cast %1 : vector<1x2x3x16x128xf32> to vector<2x3x16x128xf32>
    %cst = arith.constant dense<0.000000e+00> : vector<3x16x128xf32>
    %3 = vector.multi_reduction <add>, %2, %cst [0] : vector<2x3x16x128xf32> to vector<3x16x128xf32>
    %c0_5 = arith.constant 0 : index
    %c0_6 = arith.constant 0 : index
    %c0_7 = arith.constant 0 : index
    %c0_8 = arith.constant 0 : index
    %c0_9 = arith.constant 0 : index
    %4 = vector.load %arg3[%c0_5, %c0_6, %c0_7, %c0_8, %c0_9] : memref<2x4x3x16x128xbf16, #tpu.memory_space<vmem>>, vector<1x1x3x16x128xbf16>
    %5 = vector.shape_cast %4 : vector<1x1x3x16x128xbf16> to vector<3x16x128xbf16>
    %6 = arith.extf %5 : vector<3x16x128xbf16> to vector<3x16x128xf32>
    %7 = arith.mulf %6, %3 : vector<3x16x128xf32>
    %c1 = arith.constant 1 : index
    %c0_10 = arith.constant 0 : index
    %c0_11 = arith.constant 0 : index
    %c0_12 = arith.constant 0 : index
    %c0_13 = arith.constant 0 : index
    %8 = vector.load %arg3[%c1, %c0_10, %c0_11, %c0_12, %c0_13] : memref<2x4x3x16x128xbf16, #tpu.memory_space<vmem>>, vector<1x1x3x16x128xbf16>
    %9 = vector.shape_cast %8 : vector<1x1x3x16x128xbf16> to vector<3x16x128xbf16>
    %10 = arith.extf %9 : vector<3x16x128xbf16> to vector<3x16x128xf32>
    %11 = arith.mulf %10, %3 : vector<3x16x128xf32>
    %c0_14 = arith.constant 0 : index
    %c2 = arith.constant 2 : index
    %c0_15 = arith.constant 0 : index
    %c0_16 = arith.constant 0 : index
    %c0_17 = arith.constant 0 : index
    %12 = vector.load %arg2[%c0_14, %c2, %c0_15, %c0_16, %c0_17] : memref<1x8x3x16x128xf32, #tpu.memory_space<vmem>>, vector<1x2x3x16x128xf32>
    %13 = vector.shape_cast %12 : vector<1x2x3x16x128xf32> to vector<2x3x16x128xf32>
    %cst_18 = arith.constant dense<0.000000e+00> : vector<3x16x128xf32>
    %14 = vector.multi_reduction <add>, %13, %cst_18 [0] : vector<2x3x16x128xf32> to vector<3x16x128xf32>
    %15 = arith.addf %3, %14 : vector<3x16x128xf32>
    %c0_19 = arith.constant 0 : index
    %c1_20 = arith.constant 1 : index
    %c0_21 = arith.constant 0 : index
    %c0_22 = arith.constant 0 : index
    %c0_23 = arith.constant 0 : index
    %16 = vector.load %arg3[%c0_19, %c1_20, %c0_21, %c0_22, %c0_23] : memref<2x4x3x16x128xbf16, #tpu.memory_space<vmem>>, vector<1x1x3x16x128xbf16>
    %17 = vector.shape_cast %16 : vector<1x1x3x16x128xbf16> to vector<3x16x128xbf16>
    %18 = arith.extf %17 : vector<3x16x128xbf16> to vector<3x16x128xf32>
    %19 = arith.mulf %18, %14 : vector<3x16x128xf32>
    %20 = arith.addf %7, %19 : vector<3x16x128xf32>
    %c1_24 = arith.constant 1 : index
    %c1_25 = arith.constant 1 : index
    %c0_26 = arith.constant 0 : index
    %c0_27 = arith.constant 0 : index
    %c0_28 = arith.constant 0 : index
    %21 = vector.load %arg3[%c1_24, %c1_25, %c0_26, %c0_27, %c0_28] : memref<2x4x3x16x128xbf16, #tpu.memory_space<vmem>>, vector<1x1x3x16x128xbf16>
    %22 = vector.shape_cast %21 : vector<1x1x3x16x128xbf16> to vector<3x16x128xbf16>
    %23 = arith.extf %22 : vector<3x16x128xbf16> to vector<3x16x128xf32>
    %24 = arith.mulf %23, %14 : vector<3x16x128xf32>
    %25 = arith.addf %11, %24 : vector<3x16x128xf32>
    %c0_29 = arith.constant 0 : index
    %c4 = arith.constant 4 : index
    %c0_30 = arith.constant 0 : index
    %c0_31 = arith.constant 0 : index
    %c0_32 = arith.constant 0 : index
    %26 = vector.load %arg2[%c0_29, %c4, %c0_30, %c0_31, %c0_32] : memref<1x8x3x16x128xf32, #tpu.memory_space<vmem>>, vector<1x2x3x16x128xf32>
    %27 = vector.shape_cast %26 : vector<1x2x3x16x128xf32> to vector<2x3x16x128xf32>
    %cst_33 = arith.constant dense<0.000000e+00> : vector<3x16x128xf32>
    %28 = vector.multi_reduction <add>, %27, %cst_33 [0] : vector<2x3x16x128xf32> to vector<3x16x128xf32>
    %29 = arith.addf %15, %28 : vector<3x16x128xf32>
    %c0_34 = arith.constant 0 : index
    %c2_35 = arith.constant 2 : index
    %c0_36 = arith.constant 0 : index
    %c0_37 = arith.constant 0 : index
    %c0_38 = arith.constant 0 : index
    %30 = vector.load %arg3[%c0_34, %c2_35, %c0_36, %c0_37, %c0_38] : memref<2x4x3x16x128xbf16, #tpu.memory_space<vmem>>, vector<1x1x3x16x128xbf16>
    %31 = vector.shape_cast %30 : vector<1x1x3x16x128xbf16> to vector<3x16x128xbf16>
    %32 = arith.extf %31 : vector<3x16x128xbf16> to vector<3x16x128xf32>
    %33 = arith.mulf %32, %28 : vector<3x16x128xf32>
    %34 = arith.addf %20, %33 : vector<3x16x128xf32>
    %c1_39 = arith.constant 1 : index
    %c2_40 = arith.constant 2 : index
    %c0_41 = arith.constant 0 : index
    %c0_42 = arith.constant 0 : index
    %c0_43 = arith.constant 0 : index
    %35 = vector.load %arg3[%c1_39, %c2_40, %c0_41, %c0_42, %c0_43] : memref<2x4x3x16x128xbf16, #tpu.memory_space<vmem>>, vector<1x1x3x16x128xbf16>
    %36 = vector.shape_cast %35 : vector<1x1x3x16x128xbf16> to vector<3x16x128xbf16>
    %37 = arith.extf %36 : vector<3x16x128xbf16> to vector<3x16x128xf32>
    %38 = arith.mulf %37, %28 : vector<3x16x128xf32>
    %39 = arith.addf %25, %38 : vector<3x16x128xf32>
    %c0_44 = arith.constant 0 : index
    %c6 = arith.constant 6 : index
    %c0_45 = arith.constant 0 : index
    %c0_46 = arith.constant 0 : index
    %c0_47 = arith.constant 0 : index
    %40 = vector.load %arg2[%c0_44, %c6, %c0_45, %c0_46, %c0_47] : memref<1x8x3x16x128xf32, #tpu.memory_space<vmem>>, vector<1x2x3x16x128xf32>
    %41 = vector.shape_cast %40 : vector<1x2x3x16x128xf32> to vector<2x3x16x128xf32>
    %cst_48 = arith.constant dense<0.000000e+00> : vector<3x16x128xf32>
    %42 = vector.multi_reduction <add>, %41, %cst_48 [0] : vector<2x3x16x128xf32> to vector<3x16x128xf32>
    %43 = arith.addf %29, %42 : vector<3x16x128xf32>
    %c0_49 = arith.constant 0 : index
    %c3 = arith.constant 3 : index
    %c0_50 = arith.constant 0 : index
    %c0_51 = arith.constant 0 : index
    %c0_52 = arith.constant 0 : index
    %44 = vector.load %arg3[%c0_49, %c3, %c0_50, %c0_51, %c0_52] : memref<2x4x3x16x128xbf16, #tpu.memory_space<vmem>>, vector<1x1x3x16x128xbf16>
    %45 = vector.shape_cast %44 : vector<1x1x3x16x128xbf16> to vector<3x16x128xbf16>
    %46 = arith.extf %45 : vector<3x16x128xbf16> to vector<3x16x128xf32>
    %47 = arith.mulf %46, %42 : vector<3x16x128xf32>
    %48 = arith.addf %34, %47 : vector<3x16x128xf32>
    %c1_53 = arith.constant 1 : index
    %c3_54 = arith.constant 3 : index
    %c0_55 = arith.constant 0 : index
    %c0_56 = arith.constant 0 : index
    %c0_57 = arith.constant 0 : index
    %49 = vector.load %arg3[%c1_53, %c3_54, %c0_55, %c0_56, %c0_57] : memref<2x4x3x16x128xbf16, #tpu.memory_space<vmem>>, vector<1x1x3x16x128xbf16>
    %50 = vector.shape_cast %49 : vector<1x1x3x16x128xbf16> to vector<3x16x128xbf16>
    %51 = arith.extf %50 : vector<3x16x128xbf16> to vector<3x16x128xf32>
    %52 = arith.mulf %51, %42 : vector<3x16x128xf32>
    %53 = arith.addf %39, %52 : vector<3x16x128xf32>
    %cst_58 = arith.constant 1.250000e-01 : f32
    %54 = vector.broadcast %cst_58 : f32 to vector<3x16x128xf32>
    %55 = arith.mulf %43, %54 : vector<3x16x128xf32>
    %cst_59 = arith.constant 1.250000e-01 : f32
    %56 = vector.broadcast %cst_59 : f32 to vector<3x16x128xf32>
    %57 = arith.mulf %48, %56 : vector<3x16x128xf32>
    %58 = arith.subf %55, %57 : vector<3x16x128xf32>
    %c0_60 = arith.constant 0 : index
    %c0_61 = arith.constant 0 : index
    %c0_62 = arith.constant 0 : index
    %c0_63 = arith.constant 0 : index
    %59 = vector.load %arg7[%c0_60, %c0_61, %c0_62, %c0_63] : memref<1x12x16x128xf32, #tpu.memory_space<vmem>>, vector<1x3x16x128xf32>
    %60 = vector.shape_cast %59 : vector<1x3x16x128xf32> to vector<3x16x128xf32>
    %61 = vector.shape_cast %57 : vector<3x16x128xf32> to vector<1x3x16x128xf32>
    tpu.vector_store %arg7[%c0_60, %c0_61, %c0_62, %c0_63], %61 {strides = array<i32>} : memref<1x12x16x128xf32, #tpu.memory_space<vmem>>, vector<1x3x16x128xf32>,
    %c0_64 = arith.constant 0 : index
    %c3_65 = arith.constant 3 : index
    %c0_66 = arith.constant 0 : index
    %c0_67 = arith.constant 0 : index
    %62 = vector.load %arg7[%c0_64, %c3_65, %c0_66, %c0_67] : memref<1x12x16x128xf32, #tpu.memory_space<vmem>>, vector<1x3x16x128xf32>
    %63 = vector.shape_cast %62 : vector<1x3x16x128xf32> to vector<3x16x128xf32>
    %64 = vector.shape_cast %58 : vector<3x16x128xf32> to vector<1x3x16x128xf32>
    tpu.vector_store %arg7[%c0_64, %c3_65, %c0_66, %c0_67], %64 {strides = array<i32>} : memref<1x12x16x128xf32, #tpu.memory_space<vmem>>, vector<1x3x16x128xf32>,
    %c0_68 = arith.constant 0 : index
    %c0_69 = arith.constant 0 : index
    %c0_70 = arith.constant 0 : index
    %c0_71 = arith.constant 0 : index
    %65 = vector.load %arg4[%c0_68, %c0_69, %c0_70, %c0_71] : memref<1x12x16x128xf32, #tpu.memory_space<vmem>>, vector<1x3x16x128xf32>
    %66 = vector.shape_cast %65 : vector<1x3x16x128xf32> to vector<3x16x128xf32>
    %67 = vector.broadcast %0 : f32 to vector<3x16x128xf32>
    %68 = arith.mulf %67, %66 : vector<3x16x128xf32>
    %69 = arith.addf %57, %68 : vector<3x16x128xf32>
    %c0_72 = arith.constant 0 : index
    %c0_73 = arith.constant 0 : index
    %c0_74 = arith.constant 0 : index
    %c0_75 = arith.constant 0 : index
    %70 = vector.load %arg6[%c0_72, %c0_73, %c0_74, %c0_75] : memref<1x12x16x128xf32, #tpu.memory_space<vmem>>, vector<1x3x16x128xf32>
    %71 = vector.shape_cast %70 : vector<1x3x16x128xf32> to vector<3x16x128xf32>
    %72 = vector.shape_cast %69 : vector<3x16x128xf32> to vector<1x3x16x128xf32>
    tpu.vector_store %arg6[%c0_72, %c0_73, %c0_74, %c0_75], %72 {strides = array<i32>} : memref<1x12x16x128xf32, #tpu.memory_space<vmem>>, vector<1x3x16x128xf32>,
    %c0_76 = arith.constant 0 : index
    %c3_77 = arith.constant 3 : index
    %c0_78 = arith.constant 0 : index
    %c0_79 = arith.constant 0 : index
    %73 = vector.load %arg4[%c0_76, %c3_77, %c0_78, %c0_79] : memref<1x12x16x128xf32, #tpu.memory_space<vmem>>, vector<1x3x16x128xf32>
    %74 = vector.shape_cast %73 : vector<1x3x16x128xf32> to vector<3x16x128xf32>
    %75 = vector.broadcast %0 : f32 to vector<3x16x128xf32>
    %76 = arith.mulf %75, %74 : vector<3x16x128xf32>
    %77 = arith.addf %58, %76 : vector<3x16x128xf32>
    %c0_80 = arith.constant 0 : index
    %c3_81 = arith.constant 3 : index
    %c0_82 = arith.constant 0 : index
    %c0_83 = arith.constant 0 : index
    %78 = vector.load %arg6[%c0_80, %c3_81, %c0_82, %c0_83] : memref<1x12x16x128xf32, #tpu.memory_space<vmem>>, vector<1x3x16x128xf32>
    %79 = vector.shape_cast %78 : vector<1x3x16x128xf32> to vector<3x16x128xf32>
    %80 = vector.shape_cast %77 : vector<3x16x128xf32> to vector<1x3x16x128xf32>
    tpu.vector_store %arg6[%c0_80, %c3_81, %c0_82, %c0_83], %80 {strides = array<i32>} : memref<1x12x16x128xf32, #tpu.memory_space<vmem>>, vector<1x3x16x128xf32>,
    %cst_84 = arith.constant 1.250000e-01 : f32
    %81 = vector.broadcast %cst_84 : f32 to vector<3x16x128xf32>
    %82 = arith.mulf %53, %81 : vector<3x16x128xf32>
    %83 = arith.subf %55, %82 : vector<3x16x128xf32>
    %c0_85 = arith.constant 0 : index
    %c6_86 = arith.constant 6 : index
    %c0_87 = arith.constant 0 : index
    %c0_88 = arith.constant 0 : index
    %84 = vector.load %arg7[%c0_85, %c6_86, %c0_87, %c0_88] : memref<1x12x16x128xf32, #tpu.memory_space<vmem>>, vector<1x3x16x128xf32>
    %85 = vector.shape_cast %84 : vector<1x3x16x128xf32> to vector<3x16x128xf32>
    %86 = vector.shape_cast %82 : vector<3x16x128xf32> to vector<1x3x16x128xf32>
    tpu.vector_store %arg7[%c0_85, %c6_86, %c0_87, %c0_88], %86 {strides = array<i32>} : memref<1x12x16x128xf32, #tpu.memory_space<vmem>>, vector<1x3x16x128xf32>,
    %c0_89 = arith.constant 0 : index
    %c9 = arith.constant 9 : index
    %c0_90 = arith.constant 0 : index
    %c0_91 = arith.constant 0 : index
    %87 = vector.load %arg7[%c0_89, %c9, %c0_90, %c0_91] : memref<1x12x16x128xf32, #tpu.memory_space<vmem>>, vector<1x3x16x128xf32>
    %88 = vector.shape_cast %87 : vector<1x3x16x128xf32> to vector<3x16x128xf32>
    %89 = vector.shape_cast %83 : vector<3x16x128xf32> to vector<1x3x16x128xf32>
    tpu.vector_store %arg7[%c0_89, %c9, %c0_90, %c0_91], %89 {strides = array<i32>} : memref<1x12x16x128xf32, #tpu.memory_space<vmem>>, vector<1x3x16x128xf32>,
    %c0_92 = arith.constant 0 : index
    %c6_93 = arith.constant 6 : index
    %c0_94 = arith.constant 0 : index
    %c0_95 = arith.constant 0 : index
    %90 = vector.load %arg4[%c0_92, %c6_93, %c0_94, %c0_95] : memref<1x12x16x128xf32, #tpu.memory_space<vmem>>, vector<1x3x16x128xf32>
    %91 = vector.shape_cast %90 : vector<1x3x16x128xf32> to vector<3x16x128xf32>
    %92 = vector.broadcast %0 : f32 to vector<3x16x128xf32>
    %93 = arith.mulf %92, %91 : vector<3x16x128xf32>
    %94 = arith.addf %82, %93 : vector<3x16x128xf32>
    %c0_96 = arith.constant 0 : index
    %c6_97 = arith.constant 6 : index
    %c0_98 = arith.constant 0 : index
    %c0_99 = arith.constant 0 : index
    %95 = vector.load %arg6[%c0_96, %c6_97, %c0_98, %c0_99] : memref<1x12x16x128xf32, #tpu.memory_space<vmem>>, vector<1x3x16x128xf32>
    %96 = vector.shape_cast %95 : vector<1x3x16x128xf32> to vector<3x16x128xf32>
    %97 = vector.shape_cast %94 : vector<3x16x128xf32> to vector<1x3x16x128xf32>
    tpu.vector_store %arg6[%c0_96, %c6_97, %c0_98, %c0_99], %97 {strides = array<i32>} : memref<1x12x16x128xf32, #tpu.memory_space<vmem>>, vector<1x3x16x128xf32>,
    %c0_100 = arith.constant 0 : index
    %c9_101 = arith.constant 9 : index
    %c0_102 = arith.constant 0 : index
    %c0_103 = arith.constant 0 : index
    %98 = vector.load %arg4[%c0_100, %c9_101, %c0_102, %c0_103] : memref<1x12x16x128xf32, #tpu.memory_space<vmem>>, vector<1x3x16x128xf32>
    %99 = vector.shape_cast %98 : vector<1x3x16x128xf32> to vector<3x16x128xf32>
    %100 = vector.broadcast %0 : f32 to vector<3x16x128xf32>
    %101 = arith.mulf %100, %99 : vector<3x16x128xf32>
    %102 = arith.addf %83, %101 : vector<3x16x128xf32>
    %c0_104 = arith.constant 0 : index
    %c9_105 = arith.constant 9 : index
    %c0_106 = arith.constant 0 : index
    %c0_107 = arith.constant 0 : index
    %103 = vector.load %arg6[%c0_104, %c9_105, %c0_106, %c0_107] : memref<1x12x16x128xf32, #tpu.memory_space<vmem>>, vector<1x3x16x128xf32>
    %104 = vector.shape_cast %103 : vector<1x3x16x128xf32> to vector<3x16x128xf32>
    %105 = vector.shape_cast %102 : vector<3x16x128xf32> to vector<1x3x16x128xf32>
    tpu.vector_store %arg6[%c0_104, %c9_105, %c0_106, %c0_107], %105 {strides = array<i32>} : memref<1x12x16x128xf32, #tpu.memory_space<vmem>>, vector<1x3x16x128xf32>,
    return
  }
  func.func @transform_0(%arg0: i32, %arg1: i32) -> (i32, i32, i32, i32, i32) {
    %c0_i32 = arith.constant 0 : i32
    %c0_i32_0 = arith.constant 0 : i32
    %c0_i32_1 = arith.constant 0 : i32
    %c0_i32_2 = arith.constant 0 : i32
    return %arg1, %c0_i32, %c0_i32_0, %arg0, %c0_i32_1 : i32, i32, i32, i32, i32
  }
  func.func @transform_1(%arg0: i32, %arg1: i32) -> (i32, i32, i32, i32, i32) {
    %c0_i32 = arith.constant 0 : i32
    %c0_i32_0 = arith.constant 0 : i32
    %c0_i32_1 = arith.constant 0 : i32
    %c0_i32_2 = arith.constant 0 : i32
    %c0_i32_3 = arith.constant 0 : i32
    return %c0_i32, %c0_i32_0, %c0_i32_1, %arg0, %c0_i32_2 : i32, i32, i32, i32, i32
  }
  func.func @transform_2(%arg0: i32, %arg1: i32) -> (i32, i32, i32, i32) {
    %c0_i32 = arith.constant 0 : i32
    %c0_i32_0 = arith.constant 0 : i32
    %c0_i32_1 = arith.constant 0 : i32
    return %arg1, %c0_i32, %arg0, %c0_i32_0 : i32, i32, i32, i32
  }
  func.func @transform_3(%arg0: i32, %arg1: i32) -> i32 {
    %c0_i32 = arith.constant 0 : i32
    %c0_i32_0 = arith.constant 0 : i32
    return %c0_i32 : i32
  }
  func.func @transform_4(%arg0: i32, %arg1: i32) -> (i32, i32, i32, i32) {
    %c0_i32 = arith.constant 0 : i32
    %c0_i32_0 = arith.constant 0 : i32
    %c0_i32_1 = arith.constant 0 : i32
    return %arg1, %c0_i32, %arg0, %c0_i32_0 : i32, i32, i32, i32
  }
  func.func @transform_5(%arg0: i32, %arg1: i32) -> (i32, i32, i32, i32) {
    %c0_i32 = arith.constant 0 : i32
    %c0_i32_0 = arith.constant 0 : i32
    %c0_i32_1 = arith.constant 0 : i32
    return %arg1, %c0_i32, %arg0, %c0_i32_0 : i32, i32, i32, i32
  }
}

</mosaic_0001>

<llo_original>
// kernel: tpu_custom_call.1
$region0: #{tpu_custom_call.1}
  #allocation0 [shape = 'u32[]', space=smem, size = 0x4, offset = 0x4, fixed_abs, tag = 'smem constant byte address 0x4 - core index']
  #allocation1 [shape = 'u32[144,128]{1,0:T(1,128)}', space=vmem, size = 0x12000, scoped, tag = 'internal scratch']
  #allocation2 [shape = 'f32[1]{0:T(128)S(6)}', space=smem, size = 0x200, scoped, tag = 'scoped memory for tpu_custom_call.1']
  %s0 = inlined_call_operand.hbm [shape: f32[2,8,3,16,128], index: 0, kind: input, shape index: {}]
  %s1 = inlined_call_operand.hbm [shape: bf16[2,4,3,16,128], index: 1, kind: input, shape index: {}]
  %s2 = inlined_call_operand.hbm [shape: f32[2,12,16,128], index: 2, kind: input, shape index: {}]
  %s3 = inlined_call_operand.<no memory space> [shape: f32[1], index: 3, kind: input, shape index: {}]
  %s4 = inlined_call_operand.hbm [shape: f32[2,12,16,128], index: 4, kind: output, shape index: {0}]
  %s5 = inlined_call_operand.hbm [shape: f32[2,12,16,128], index: 5, kind: output, shape index: {1}]
  %6 = xla_tuple %s4, %s5
  %s7 = sld [smem:[#allocation0]]
  $region69: #{tpu_custom_call.1} parent=0
    _
  %s9 = ssub.s32 1, %s7
  %s10 = scalar_select 0, %s9, %s7
  %11 = sst [smem:[#allocation2]] %s3
  $region1: #{tpu_custom_call.1} parent=0
    #allocation3 [shape = 'u8[393216]{0}', space=vmem, size = 0x60000, scoped, tag = 'input window, operand 0']
    #allocation4 [shape = 's32[2]{0}', space=sflag, size = 0x8, scoped, tag = 'scoped memory for tpu_custom_call.1']
    #allocation5 [shape = 's32[2]{0}', space=sflag, size = 0x8, scoped, tag = 'scoped memory for tpu_custom_call.1']
    #allocation6 [shape = 'u8[98304]{0}', space=vmem, size = 0x18000, scoped, tag = 'input window, operand 1, single buffered']
    #allocation7 [shape = 's32[1]{0}', space=sflag, size = 0x4, scoped, tag = 'scoped memory for tpu_custom_call.1']
    #allocation8 [shape = 'u8[196608]{0}', space=vmem, size = 0x30000, scoped, tag = 'input window, operand 2']
    #allocation9 [shape = 'u8[196608]{0}', space=vmem, size = 0x30000, scoped, tag = 'output window, operand 0']
    #allocation10 [shape = 'u8[196608]{0}', space=vmem, size = 0x30000, scoped, tag = 'output window, operand 1']
    #allocation11 [shape = 's32[2]{0}', space=sflag, size = 0x8, scoped, tag = 'scoped memory for tpu_custom_call.1']
    %12 = vsyncpa [#allocation4], 0
    %s13 = scalar_lea.sflag [#allocation4], 1
    %14 = vsyncpa %s13, 0
    %15 = vsyncpa [#allocation7], 0
    %16 = vsyncpa [#allocation5], 0
    %s17 = scalar_lea.sflag [#allocation5], 1
    %18 = vsyncpa %s17, 0
    %19 = vsyncpa [#allocation11], 0
    %s20 = scalar_lea.sflag [#allocation11], 1
    %21 = vsyncpa %s20, 0
    loop: start=0, step=1, limit=4
    $region2: #{tpu_custom_call.1} parent=1 // loop_pre_header
      _
    $region3: #{tpu_custom_call.1} parent=1 // loop_header
      %s23 = sphi 0, %s27
      %p24 = scmp.ge.s32.totalorder %s23, 4
      %s30 = sphi 0, %s42
      %s31 = sphi 0, %s38
      %s32 = sphi 0, %s30
      %s33 = sphi 0, %s31
      %s34 = sphi 0, %s32
      %s35 = sphi 0, %s33
      %s47 = sphi 0, %s49
      %s50 = sphi 0, %s47
      %s51 = sphi 0, %s50
      %s67 = sphi 0, %s51
      %s73 = sphi 0, %s75
      %s76 = sphi 0, %s73
      %s77 = sphi 0, %s76
      %s93 = sphi 0, %s77
      %s101 = sphi 0, %s103
      %s104 = sphi 0, %s101
      %s105 = sphi 0, %s104
      %s121 = sphi 0, %s105
      %s125 = sphi 0, %s125
      %s127 = sphi 0, %s125
      %s128 = sphi 0, %s127
      %s142 = sphi 0, %s128
      %s150 = sphi 0, %s152
      %s153 = sphi 0, %s150
      %s154 = sphi 0, %s153
      %s170 = sphi 0, %s154
      %s178 = sphi 0, %s180
      %s181 = sphi 0, %s178
      %s182 = sphi 0, %s181
      %s198 = sphi 0, %s182
    $region4: #{tpu_custom_call.1} parent=1 // loop_header_branch
      %26 = sbr.rel (%p24) target = $region8
    $region5: #{tpu_custom_call.1} parent=1 // loop_body
      %s28 = ssub.s32 %s23, 1
      %s29 = ssub.s32 %s23, 2
      %s36 = sadd.s32 1, %s31
      %p37 = scmp.ge.s32.totalorder %s36, 2
      %s38 = scalar_select %p37, 0, %s36
      %s39 = sadd.s32 1, %s30
      %s40 = scalar_select %p37, %s39, %s30
      %p41 = scmp.ge.s32.totalorder %s40, 1
      %s42 = scalar_select %p41, 0, %s40
      %s43 = ssub.s32 %s31, %s38
      %s44 = ssub.s32 %s30, %s42
      %s45 = sor.u32 %s43, %s44
      %p46 = scmp.eq.s32.totalorder %s45, 0
      %s48 = sadd.s32 %s47, 1
      %s49 = scalar_select %p46, %s47, %s48
      %p52 = pneg %p46
      %p53 = scmp.eq.s32.totalorder %s23, 1
      %p54 = por %p52, %p53
      %p55 = scmp.ne.s32.totalorder %s47, %s50
      %p56 = scmp.eq.s32.totalorder %s23, 0
      %p57 = por %p55, %p56
      %p58 = scmp.ne.s32.totalorder %s47, %s50
      %p59 = scmp.eq.s32.totalorder %s28, 1
      %p60 = por %p58, %p59
      %p61 = scmp.ne.s32.totalorder %s50, %s51
      %p62 = scmp.eq.s32.totalorder %s28, 0
      %p63 = por %p61, %p62
      %p64 = scmp.ne.s32.totalorder %s50, %s51
      %p65 = scmp.eq.s32.totalorder %s29, 1
      %p66 = por %p64, %p65
      %p68 = scmp.ne.s32.totalorder %s51, %s67
      %p69 = scmp.eq.s32.totalorder %s29, 0
      %p70 = por %p68, %p69
      %s71 = ssub.s32 %s30, %s42
      %p72 = scmp.eq.s32.totalorder %s71, 0
      %s74 = sadd.s32 %s73, 1
      %s75 = scalar_select %p72, %s73, %s74
      %p78 = pneg %p72
      %p79 = scmp.eq.s32.totalorder %s23, 1
      %p80 = por %p78, %p79
      %p81 = scmp.ne.s32.totalorder %s73, %s76
      %p82 = scmp.eq.s32.totalorder %s23, 0
      %p83 = por %p81, %p82
      %p84 = scmp.ne.s32.totalorder %s73, %s76
      %p85 = scmp.eq.s32.totalorder %s28, 1
      %p86 = por %p84, %p85
      %p87 = scmp.ne.s32.totalorder %s76, %s77
      %p88 = scmp.eq.s32.totalorder %s28, 0
      %p89 = por %p87, %p88
      %p90 = scmp.ne.s32.totalorder %s76, %s77
      %p91 = scmp.eq.s32.totalorder %s29, 1
      %p92 = por %p90, %p91
      %p94 = scmp.ne.s32.totalorder %s77, %s93
      %p95 = scmp.eq.s32.totalorder %s29, 0
      %p96 = por %p94, %p95
      %s97 = ssub.s32 %s31, %s38
      %s98 = ssub.s32 %s30, %s42
      %s99 = sor.u32 %s97, %s98
      %p100 = scmp.eq.s32.totalorder %s99, 0
      %s102 = sadd.s32 %s101, 1
      %s103 = scalar_select %p100, %s101, %s102
      %p106 = pneg %p100
      %p107 = scmp.eq.s32.totalorder %s23, 1
      %p108 = por %p106, %p107
      %p109 = scmp.ne.s32.totalorder %s101, %s104
      %p110 = scmp.eq.s32.totalorder %s23, 0
      %p111 = por %p109, %p110
      %p112 = scmp.ne.s32.totalorder %s101, %s104
      %p113 = scmp.eq.s32.totalorder %s28, 1
      %p114 = por %p112, %p113
      %p115 = scmp.ne.s32.totalorder %s104, %s105
      %p116 = scmp.eq.s32.totalorder %s28, 0
      %p117 = por %p115, %p116
      %p118 = scmp.ne.s32.totalorder %s104, %s105
      %p119 = scmp.eq.s32.totalorder %s29, 1
      %p120 = por %p118, %p119
      %p122 = scmp.ne.s32.totalorder %s105, %s121
      %p123 = scmp.eq.s32.totalorder %s29, 0
      %p124 = por %p122, %p123
      %s126 = sadd.s32 %s125, 1
      %p129 = scmp.eq.s32.totalorder %s23, 1
      %p130 = scmp.ne.s32.totalorder %s125, %s127
      %p131 = scmp.eq.s32.totalorder %s23, 0
      %p132 = por %p130, %p131
      %p133 = scmp.ne.s32.totalorder %s125, %s127
      %p134 = scmp.eq.s32.totalorder %s28, 1
      %p135 = por %p133, %p134
      %p136 = scmp.ne.s32.totalorder %s127, %s128
      %p137 = scmp.eq.s32.totalorder %s28, 0
      %p138 = por %p136, %p137
      %p139 = scmp.ne.s32.totalorder %s127, %s128
      %p140 = scmp.eq.s32.totalorder %s29, 1
      %p141 = por %p139, %p140
      %p143 = scmp.ne.s32.totalorder %s128, %s142
      %p144 = scmp.eq.s32.totalorder %s29, 0
      %p145 = por %p143, %p144
      %s146 = ssub.s32 %s31, %s38
      %s147 = ssub.s32 %s30, %s42
      %s148 = sor.u32 %s146, %s147
      %p149 = scmp.eq.s32.totalorder %s148, 0
      %s151 = sadd.s32 %s150, 1
      %s152 = scalar_select %p149, %s150, %s151
      %p155 = pneg %p149
      %p156 = scmp.eq.s32.totalorder %s23, 1
      %p157 = por %p155, %p156
      %p158 = scmp.ne.s32.totalorder %s150, %s153
      %p159 = scmp.eq.s32.totalorder %s23, 0
      %p160 = por %p158, %p159
      %p161 = scmp.ne.s32.totalorder %s150, %s153
      %p162 = scmp.eq.s32.totalorder %s28, 1
      %p163 = por %p161, %p162
      %p164 = scmp.ne.s32.totalorder %s153, %s154
      %p165 = scmp.eq.s32.totalorder %s28, 0
      %p166 = por %p164, %p165
      %p167 = scmp.ne.s32.totalorder %s153, %s154
      %p168 = scmp.eq.s32.totalorder %s29, 1
      %p169 = por %p167, %p168
      %p171 = scmp.ne.s32.totalorder %s154, %s170
      %p172 = scmp.eq.s32.totalorder %s29, 0
      %p173 = por %p171, %p172
      %s174 = ssub.s32 %s31, %s38
      %s175 = ssub.s32 %s30, %s42
      %s176 = sor.u32 %s174, %s175
      %p177 = scmp.eq.s32.totalorder %s176, 0
      %s179 = sadd.s32 %s178, 1
      %s180 = scalar_select %p177, %s178, %s179
      %p183 = pneg %p177
      %p184 = scmp.eq.s32.totalorder %s23, 1
      %p185 = por %p183, %p184
      %p186 = scmp.ne.s32.totalorder %s178, %s181
      %p187 = scmp.eq.s32.totalorder %s23, 0
      %p188 = por %p186, %p187
      %p189 = scmp.ne.s32.totalorder %s178, %s181
      %p190 = scmp.eq.s32.totalorder %s28, 1
      %p191 = por %p189, %p190
      %p192 = scmp.ne.s32.totalorder %s181, %s182
      %p193 = scmp.eq.s32.totalorder %s28, 0
      %p194 = por %p192, %p193
      %p195 = scmp.ne.s32.totalorder %s181, %s182
      %p196 = scmp.eq.s32.totalorder %s29, 1
      %p197 = por %p195, %p196
      %p199 = scmp.ne.s32.totalorder %s182, %s198
      %p200 = scmp.eq.s32.totalorder %s29, 0
      %p201 = por %p199, %p200
      %p202 = scmp.le.s32.totalorder 1, %s23
      %p203 = scmp.lt.s32.totalorder %s23, 3
      %p204 = pnand %p202, %p203
      %p205 = pneg %p204
      // Predicated region
      $region9: #{tpu_custom_call.1} parent=5 // pred_check
        _
      $region10: #{tpu_custom_call.1} parent=5 // pred_check_branch
        %207 = sbr.rel (%p204) target = $region12
      $region11: #{tpu_custom_call.1} parent=5 // pred_region
        %s208 = ssub.s32 %s23, 1
        // Predicated region
        $region13: #{tpu_custom_call.1} parent=11 // pred_check
          %p209 = pneg %p89
        $region14: #{tpu_custom_call.1} parent=11 // pred_check_branch
          %211 = sbr.rel (%p209) target = $region16
        $region15: #{tpu_custom_call.1} parent=11 // pred_region
          %s212 = smul.u32 2, %s32
          %s214 = ssub.s32 3072, 3072
          %215 = vsyncadd [#allocation7], %s214
          %s216 = smul.addr %s212, 64
          %s217 = scalar_lea.hbm %s1, %s216
          %s218 = sshll.u32 [#allocation6], 4
          %s219 = int_to_ptr.vmem [resolvable:$true] %s218
          %224 = dma.hbm_to_vmem [thread:$0]  %s217, 3072, %s219, [#allocation7], 64, 64, 4
        $region16: #{tpu_custom_call.1} parent=11 // pred_fallthru
          _
        // Predicated region
        $region17: #{tpu_custom_call.1} parent=11 // pred_check
          %p225 = pneg %p138
        $region18: #{tpu_custom_call.1} parent=11 // pred_check_branch
          %227 = sbr.rel (%p225) target = $region20
        $region19: #{tpu_custom_call.1} parent=11 // pred_region
          _
        $region20: #{tpu_custom_call.1} parent=11 // pred_fallthru
          _
      $region12: #{tpu_custom_call.1} parent=5 // pred_fallthru
        _
      %p228 = scmp.lt.s32.totalorder %s23, 2
      // Predicated region
      $region21: #{tpu_custom_call.1} parent=5 // pred_check
        %p229 = pneg %p228
      $region22: #{tpu_custom_call.1} parent=5 // pred_check_branch
        %231 = sbr.rel (%p229) target = $region24
      $region23: #{tpu_custom_call.1} parent=5 // pred_region
        // Predicated region
        $region25: #{tpu_custom_call.1} parent=23 // pred_check
          %p232 = pneg %p57
        $region26: #{tpu_custom_call.1} parent=23 // pred_check_branch
          %234 = sbr.rel (%p232) target = $region28
        $region27: #{tpu_custom_call.1} parent=23 // pred_region
          %s235 = sand.u32 %s23, 1
          %s236 = scalar_lea.sflag [#allocation4], %s235
          %s237 = sand.u32 %s47, 1
          %s238 = smul.addr %s237, 384
          %s239 = scalar_lea.vmem [#allocation3], %s238
          %s240 = smul.u32 2, %s30
          %s242 = ssub.s32 6144, 6144
          %243 = vsyncadd %s236, %s242
          %s244 = smul.addr %s31, 48
          %s245 = sadd.s32 %s240, %s244
          %s246 = smul.addr %s245, 128
          %s247 = scalar_lea.hbm %s0, %s246
          %s248 = sshll.u32 %s239, 4
          %s249 = int_to_ptr.vmem [resolvable:$true] %s248
          %254 = dma.hbm_to_vmem [thread:$0]  %s247, 6144, %s249, %s236, 128, 128, 8
        $region28: #{tpu_custom_call.1} parent=23 // pred_fallthru
          _
        // Predicated region
        $region29: #{tpu_custom_call.1} parent=23 // pred_check
          %p255 = pneg %p111
        $region30: #{tpu_custom_call.1} parent=23 // pred_check_branch
          %257 = sbr.rel (%p255) target = $region32
        $region31: #{tpu_custom_call.1} parent=23 // pred_region
          %s258 = sand.u32 %s23, 1
          %s259 = scalar_lea.sflag [#allocation4], %s258
          %s260 = sand.u32 %s101, 1
          %s261 = smul.addr %s260, 192
          %s262 = scalar_lea.vmem [#allocation8], %s261
          %s263 = smul.u32 2, %s30
          %s265 = ssub.s32 3072, 3072
          %266 = vsyncadd %s259, %s265
          %s267 = smul.addr %s31, 24
          %s268 = sadd.s32 %s263, %s267
          %s269 = smul.addr %s268, 128
          %s270 = scalar_lea.hbm %s2, %s269
          %s271 = sshll.u32 %s262, 4
          %s272 = int_to_ptr.vmem [resolvable:$true] %s271
          %277 = dma.hbm_to_vmem [thread:$0]  %s270, 3072, %s272, %s259, 128, 128, 8
        $region32: #{tpu_custom_call.1} parent=23 // pred_fallthru
          _
      $region24: #{tpu_custom_call.1} parent=5 // pred_fallthru
        _
      %p278 = scmp.le.s32.totalorder 1, %s23
      %p279 = scmp.lt.s32.totalorder %s23, 3
      %p280 = pnand %p278, %p279
      %p281 = pneg %p280
      // Predicated region
      $region33: #{tpu_custom_call.1} parent=5 // pred_check
        _
      $region34: #{tpu_custom_call.1} parent=5 // pred_check_branch
        %283 = sbr.rel (%p280) target = $region36
      $region35: #{tpu_custom_call.1} parent=5 // pred_region
        %s284 = ssub.s32 %s23, 1
        %s285 = sand.u32 %s28, 1
        %s286 = scalar_lea.sflag [#allocation4], %s285
        %s287 = sand.u32 %s50, 1
        %s288 = smul.addr %s287, 384
        %s289 = scalar_lea.vmem [#allocation3], %s288
        // Predicated region
        $region37: #{tpu_custom_call.1} parent=35 // pred_check
          %p290 = pneg %p63
        $region38: #{tpu_custom_call.1} parent=35 // pred_check_branch
          %292 = sbr.rel (%p290) target = $region40
        $region39: #{tpu_custom_call.1} parent=35 // pred_region
          %293 = dma.done %s286, 6144
        $region40: #{tpu_custom_call.1} parent=35 // pred_fallthru
          _
        // Predicated region
        $region41: #{tpu_custom_call.1} parent=35 // pred_check
          %p294 = pneg %p89
        $region42: #{tpu_custom_call.1} parent=35 // pred_check_branch
          %296 = sbr.rel (%p294) target = $region44
        $region43: #{tpu_custom_call.1} parent=35 // pred_region
          %297 = dma.done [#allocation7], 3072
        $region44: #{tpu_custom_call.1} parent=35 // pred_fallthru
          _
        %s298 = sand.u32 %s28, 1
        %s299 = scalar_lea.sflag [#allocation4], %s298
        %s300 = sand.u32 %s104, 1
        %s301 = smul.addr %s300, 192
        %s302 = scalar_lea.vmem [#allocation8], %s301
        // Predicated region
        $region45: #{tpu_custom_call.1} parent=35 // pred_check
          %p303 = pneg %p117
        $region46: #{tpu_custom_call.1} parent=35 // pred_check_branch
          %305 = sbr.rel (%p303) target = $region48
        $region47: #{tpu_custom_call.1} parent=35 // pred_region
          %306 = dma.done %s299, 3072
        $region48: #{tpu_custom_call.1} parent=35 // pred_fallthru
          _
        %s307 = sand.u32 %s28, 1
        %s308 = scalar_lea.sflag [#allocation4], %s307
        %s309 = sand.u32 %s50, 1
        %s310 = smul.addr %s309, 384
        %s311 = scalar_lea.vmem [#allocation3], %s310
        %p312 = pneg %p63
        %p313 = pneg %p60
        %p314 = pneg %p89
        %p315 = pneg %p86
        %s316 = sand.u32 %s28, 1
        %s317 = scalar_lea.sflag [#allocation4], %s316
        %s318 = sand.u32 %s104, 1
        %s319 = smul.addr %s318, 192
        %s320 = scalar_lea.vmem [#allocation8], %s319
        %p321 = pneg %p117
        %p322 = pneg %p114
        %p323 = pneg %p138
        %p324 = pneg %p135
        %p325 = pneg %p166
        %p326 = pneg %p163
        %s327 = sand.u32 %s153, 1
        %s328 = scalar_lea.sflag [#allocation5], %s327
        %s329 = sand.u32 %s153, 1
        %s330 = smul.addr %s329, 192
        %s331 = scalar_lea.vmem [#allocation9], %s330
        %p332 = pneg %p194
        %p333 = pneg %p191
        %s334 = sand.u32 %s181, 1
        %s335 = scalar_lea.sflag [#allocation11], %s334
        %s336 = sand.u32 %s181, 1
        %s337 = smul.addr %s336, 192
        %s338 = scalar_lea.vmem [#allocation10], %s337
        %s339 = smul.u32 2, %s32
        %s340 = smul.u32 2, %s32
        %s341 = smul.u32 2, %s32
        %s342 = smul.u32 2, %s32
        %s343 = smul.u32 2, %s32
        %s344 = sld [smem:[#allocation2]]
        %v345 = vld [vmem:[%s289] sm:$0xff]
        %v346 = vld [vmem:[%s289 + $0x8] sm:$0xff]
        %v347 = vld [vmem:[%s289 + $0x10] sm:$0xff]
        %v348 = vld [vmem:[%s289 + $0x18] sm:$0xff]
        %v349 = vld [vmem:[%s289 + $0x20] sm:$0xff]
        %v350 = vld [vmem:[%s289 + $0x28] sm:$0xff]
        %v351 = vld [vmem:[%s289 + $0x30] sm:$0xff]
        %v352 = vld [vmem:[%s289 + $0x38] sm:$0xff]
        %v353 = vld [vmem:[%s289 + $0x40] sm:$0xff]
        %v354 = vld [vmem:[%s289 + $0x48] sm:$0xff]
        %v355 = vld [vmem:[%s289 + $0x50] sm:$0xff]
        %v356 = vld [vmem:[%s289 + $0x58] sm:$0xff]
        %v357 = vadd.f32 %v345, %v351
        %v358 = vadd.f32 %v346, %v352
        %v359 = vadd.f32 %v347, %v353
        %v360 = vadd.f32 %v348, %v354
        %v361 = vadd.f32 %v349, %v355
        %v362 = vadd.f32 %v350, %v356
        %v363 = vld [vmem:[#allocation6] sm:$0xf]
        %v364 = vld [vmem:[#allocation6 + $0x4] sm:$0xf]
        %v365 = vld [vmem:[#allocation6 + $0x8] sm:$0xf]
        %v366 = vld [vmem:[#allocation6 + $0xc] sm:$0xf]
        %v367 = vld [vmem:[#allocation6 + $0x10] sm:$0xf]
        %v368 = vld [vmem:[#allocation6 + $0x14] sm:$0xf]
        %v369 = vunpack.c.l.bf16 %v363
        %v370 = vunpack.c.l.bf16 %v364
        %v371 = vunpack.c.l.bf16 %v365
        %v372 = vunpack.c.l.bf16 %v366
        %v373 = vunpack.c.l.bf16 %v367
        %v374 = vunpack.c.l.bf16 %v368
        %v375 = vmul.f32 %v369, %v357
        %v376 = vmul.f32 %v370, %v358
        %v377 = vmul.f32 %v371, %v359
        %v378 = vmul.f32 %v372, %v360
        %v379 = vmul.f32 %v373, %v361
        %v380 = vmul.f32 %v374, %v362
        %s381 = scalar_lea.vmem [#allocation6], 96
        %v382 = vld [vmem:[%s381] sm:$0xf]
        %v383 = vld [vmem:[%s381 + $0x4] sm:$0xf]
        %v384 = vld [vmem:[%s381 + $0x8] sm:$0xf]
        %v385 = vld [vmem:[%s381 + $0xc] sm:$0xf]
        %v386 = vld [vmem:[%s381 + $0x10] sm:$0xf]
        %v387 = vld [vmem:[%s381 + $0x14] sm:$0xf]
        %v388 = vunpack.c.l.bf16 %v382
        %v389 = vunpack.c.l.bf16 %v383
        %v390 = vunpack.c.l.bf16 %v384
        %v391 = vunpack.c.l.bf16 %v385
        %v392 = vunpack.c.l.bf16 %v386
        %v393 = vunpack.c.l.bf16 %v387
        %v394 = vmul.f32 %v388, %v357
        %v395 = vmul.f32 %v389, %v358
        %v396 = vmul.f32 %v390, %v359
        %v397 = vmul.f32 %v391, %v360
        %v398 = vmul.f32 %v392, %v361
        %v399 = vmul.f32 %v393, %v362
        %s400 = scalar_lea.vmem %s289, 96 [#allocation3]
        %v401 = vld [vmem:[%s400] sm:$0xff]
        %v402 = vld [vmem:[%s400 + $0x8] sm:$0xff]
        %v403 = vld [vmem:[%s400 + $0x10] sm:$0xff]
        %v404 = vld [vmem:[%s400 + $0x18] sm:$0xff]
        %v405 = vld [vmem:[%s400 + $0x20] sm:$0xff]
        %v406 = vld [vmem:[%s400 + $0x28] sm:$0xff]
        %v407 = vld [vmem:[%s400 + $0x30] sm:$0xff]
        %v408 = vld [vmem:[%s400 + $0x38] sm:$0xff]
        %v409 = vld [vmem:[%s400 + $0x40] sm:$0xff]
        %v410 = vld [vmem:[%s400 + $0x48] sm:$0xff]
        %v411 = vld [vmem:[%s400 + $0x50] sm:$0xff]
        %v412 = vld [vmem:[%s400 + $0x58] sm:$0xff]
        %v413 = vadd.f32 %v401, %v407
        %v414 = vadd.f32 %v402, %v408
        %v415 = vadd.f32 %v403, %v409
        %v416 = vadd.f32 %v404, %v410
        %v417 = vadd.f32 %v405, %v411
        %v418 = vadd.f32 %v406, %v412
        %v419 = vadd.f32 %v357, %v413
        %v420 = vadd.f32 %v358, %v414
        %v421 = vadd.f32 %v359, %v415
        %v422 = vadd.f32 %v360, %v416
        %v423 = vadd.f32 %v361, %v417
        %v424 = vadd.f32 %v362, %v418
        %s425 = scalar_lea.vmem [#allocation6], 24
        %v426 = vld [vmem:[%s425] sm:$0xf]
        %v427 = vld [vmem:[%s425 + $0x4] sm:$0xf]
        %v428 = vld [vmem:[%s425 + $0x8] sm:$0xf]
        %v429 = vld [vmem:[%s425 + $0xc] sm:$0xf]
        %v430 = vld [vmem:[%s425 + $0x10] sm:$0xf]
        %v431 = vld [vmem:[%s425 + $0x14] sm:$0xf]
        %v432 = vunpack.c.l.bf16 %v426
        %v433 = vunpack.c.l.bf16 %v427
        %v434 = vunpack.c.l.bf16 %v428
        %v435 = vunpack.c.l.bf16 %v429
        %v436 = vunpack.c.l.bf16 %v430
        %v437 = vunpack.c.l.bf16 %v431
        %v438 = vmul.f32 %v432, %v413
        %v439 = vmul.f32 %v433, %v414
        %v440 = vmul.f32 %v434, %v415
        %v441 = vmul.f32 %v435, %v416
        %v442 = vmul.f32 %v436, %v417
        %v443 = vmul.f32 %v437, %v418
        %v444 = vadd.f32 %v375, %v438
        %v445 = vadd.f32 %v376, %v439
        %v446 = vadd.f32 %v377, %v440
        %v447 = vadd.f32 %v378, %v441
        %v448 = vadd.f32 %v379, %v442
        %v449 = vadd.f32 %v380, %v443
        %s450 = scalar_lea.vmem [#allocation6], 120
        %v451 = vld [vmem:[%s450] sm:$0xf]
        %v452 = vld [vmem:[%s450 + $0x4] sm:$0xf]
        %v453 = vld [vmem:[%s450 + $0x8] sm:$0xf]
        %v454 = vld [vmem:[%s450 + $0xc] sm:$0xf]
        %v455 = vld [vmem:[%s450 + $0x10] sm:$0xf]
        %v456 = vld [vmem:[%s450 + $0x14] sm:$0xf]
        %v457 = vunpack.c.l.bf16 %v451
        %v458 = vunpack.c.l.bf16 %v452
        %v459 = vunpack.c.l.bf16 %v453
        %v460 = vunpack.c.l.bf16 %v454
        %v461 = vunpack.c.l.bf16 %v455
        %v462 = vunpack.c.l.bf16 %v456
        %v463 = vmul.f32 %v457, %v413
        %v464 = vmul.f32 %v458, %v414
        %v465 = vmul.f32 %v459, %v415
        %v466 = vmul.f32 %v460, %v416
        %v467 = vmul.f32 %v461, %v417
        %v468 = vmul.f32 %v462, %v418
        %v469 = vadd.f32 %v394, %v463
        %v470 = vadd.f32 %v395, %v464
        %v471 = vadd.f32 %v396, %v465
        %v472 = vadd.f32 %v397, %v466
        %v473 = vadd.f32 %v398, %v467
        %v474 = vadd.f32 %v399, %v468
        %s475 = scalar_lea.vmem %s289, 192 [#allocation3]
        %v476 = vld [vmem:[%s475] sm:$0xff]
        %v477 = vld [vmem:[%s475 + $0x8] sm:$0xff]
        %v478 = vld [vmem:[%s475 + $0x10] sm:$0xff]
        %v479 = vld [vmem:[%s475 + $0x18] sm:$0xff]
        %v480 = vld [vmem:[%s475 + $0x20] sm:$0xff]
        %v481 = vld [vmem:[%s475 + $0x28] sm:$0xff]
        %v482 = vld [vmem:[%s475 + $0x30] sm:$0xff]
        %v483 = vld [vmem:[%s475 + $0x38] sm:$0xff]
        %v484 = vld [vmem:[%s475 + $0x40] sm:$0xff]
        %v485 = vld [vmem:[%s475 + $0x48] sm:$0xff]
        %v486 = vld [vmem:[%s475 + $0x50] sm:$0xff]
        %v487 = vld [vmem:[%s475 + $0x58] sm:$0xff]
        %v488 = vadd.f32 %v476, %v482
        %v489 = vadd.f32 %v477, %v483
        %v490 = vadd.f32 %v478, %v484
        %v491 = vadd.f32 %v479, %v485
        %v492 = vadd.f32 %v480, %v486
        %v493 = vadd.f32 %v481, %v487
        %v494 = vadd.f32 %v419, %v488
        %v495 = vadd.f32 %v420, %v489
        %v496 = vadd.f32 %v421, %v490
        %v497 = vadd.f32 %v422, %v491
        %v498 = vadd.f32 %v423, %v492
        %v499 = vadd.f32 %v424, %v493
        %s500 = scalar_lea.vmem [#allocation6], 48
        %v501 = vld [vmem:[%s500] sm:$0xf]
        %v502 = vld [vmem:[%s500 + $0x4] sm:$0xf]
        %v503 = vld [vmem:[%s500 + $0x8] sm:$0xf]
        %v504 = vld [vmem:[%s500 + $0xc] sm:$0xf]
        %v505 = vld [vmem:[%s500 + $0x10] sm:$0xf]
        %v506 = vld [vmem:[%s500 + $0x14] sm:$0xf]
        %v507 = vunpack.c.l.bf16 %v501
        %v508 = vunpack.c.l.bf16 %v502
        %v509 = vunpack.c.l.bf16 %v503
        %v510 = vunpack.c.l.bf16 %v504
        %v511 = vunpack.c.l.bf16 %v505
        %v512 = vunpack.c.l.bf16 %v506
        %v513 = vmul.f32 %v507, %v488
        %v514 = vmul.f32 %v508, %v489
        %v515 = vmul.f32 %v509, %v490
        %v516 = vmul.f32 %v510, %v491
        %v517 = vmul.f32 %v511, %v492
        %v518 = vmul.f32 %v512, %v493
        %v519 = vadd.f32 %v444, %v513
        %v520 = vadd.f32 %v445, %v514
        %v521 = vadd.f32 %v446, %v515
        %v522 = vadd.f32 %v447, %v516
        %v523 = vadd.f32 %v448, %v517
        %v524 = vadd.f32 %v449, %v518
        %s525 = scalar_lea.vmem [#allocation6], 144
        %v526 = vld [vmem:[%s525] sm:$0xf]
        %v527 = vld [vmem:[%s525 + $0x4] sm:$0xf]
        %v528 = vld [vmem:[%s525 + $0x8] sm:$0xf]
        %v529 = vld [vmem:[%s525 + $0xc] sm:$0xf]
        %v530 = vld [vmem:[%s525 + $0x10] sm:$0xf]
        %v531 = vld [vmem:[%s525 + $0x14] sm:$0xf]
        %v532 = vunpack.c.l.bf16 %v526
        %v533 = vunpack.c.l.bf16 %v527
        %v534 = vunpack.c.l.bf16 %v528
        %v535 = vunpack.c.l.bf16 %v529
        %v536 = vunpack.c.l.bf16 %v530
        %v537 = vunpack.c.l.bf16 %v531
        %v538 = vmul.f32 %v532, %v488
        %v539 = vmul.f32 %v533, %v489
        %v540 = vmul.f32 %v534, %v490
        %v541 = vmul.f32 %v535, %v491
        %v542 = vmul.f32 %v536, %v492
        %v543 = vmul.f32 %v537, %v493
        %v544 = vadd.f32 %v469, %v538
        %v545 = vadd.f32 %v470, %v539
        %v546 = vadd.f32 %v471, %v540
        %v547 = vadd.f32 %v472, %v541
        %v548 = vadd.f32 %v473, %v542
        %v549 = vadd.f32 %v474, %v543
        %s550 = scalar_lea.vmem %s289, 288 [#allocation3]
        %v551 = vld [vmem:[%s550] sm:$0xff]
        %v552 = vld [vmem:[%s550 + $0x8] sm:$0xff]
        %v553 = vld [vmem:[%s550 + $0x10] sm:$0xff]
        %v554 = vld [vmem:[%s550 + $0x18] sm:$0xff]
        %v555 = vld [vmem:[%s550 + $0x20] sm:$0xff]
        %v556 = vld [vmem:[%s550 + $0x28] sm:$0xff]
        %v557 = vld [vmem:[%s550 + $0x30] sm:$0xff]
        %v558 = vld [vmem:[%s550 + $0x38] sm:$0xff]
        %v559 = vld [vmem:[%s550 + $0x40] sm:$0xff]
        %v560 = vld [vmem:[%s550 + $0x48] sm:$0xff]
        %v561 = vld [vmem:[%s550 + $0x50] sm:$0xff]
        %v562 = vld [vmem:[%s550 + $0x58] sm:$0xff]
        %v563 = vadd.f32 %v551, %v557
        %v564 = vadd.f32 %v552, %v558
        %v565 = vadd.f32 %v553, %v559
        %v566 = vadd.f32 %v554, %v560
        %v567 = vadd.f32 %v555, %v561
        %v568 = vadd.f32 %v556, %v562
        %v569 = vadd.f32 %v494, %v563
        %v570 = vadd.f32 %v495, %v564
        %v571 = vadd.f32 %v496, %v565
        %v572 = vadd.f32 %v497, %v566
        %v573 = vadd.f32 %v498, %v567
        %v574 = vadd.f32 %v499, %v568
        %s575 = scalar_lea.vmem [#allocation6], 72
        %v576 = vld [vmem:[%s575] sm:$0xf]
        %v577 = vld [vmem:[%s575 + $0x4] sm:$0xf]
        %v578 = vld [vmem:[%s575 + $0x8] sm:$0xf]
        %v579 = vld [vmem:[%s575 + $0xc] sm:$0xf]
        %v580 = vld [vmem:[%s575 + $0x10] sm:$0xf]
        %v581 = vld [vmem:[%s575 + $0x14] sm:$0xf]
        %v582 = vunpack.c.l.bf16 %v576
        %v583 = vunpack.c.l.bf16 %v577
        %v584 = vunpack.c.l.bf16 %v578
        %v585 = vunpack.c.l.bf16 %v579
        %v586 = vunpack.c.l.bf16 %v580
        %v587 = vunpack.c.l.bf16 %v581
        %v588 = vmul.f32 %v582, %v563
        %v589 = vmul.f32 %v583, %v564
        %v590 = vmul.f32 %v584, %v565
        %v591 = vmul.f32 %v585, %v566
        %v592 = vmul.f32 %v586, %v567
        %v593 = vmul.f32 %v587, %v568
        %v594 = vadd.f32 %v519, %v588
        %v595 = vadd.f32 %v520, %v589
        %v596 = vadd.f32 %v521, %v590
        %v597 = vadd.f32 %v522, %v591
        %v598 = vadd.f32 %v523, %v592
        %v599 = vadd.f32 %v524, %v593
        %s600 = scalar_lea.vmem [#allocation6], 168
        %v601 = vld [vmem:[%s600] sm:$0xf]
        %v602 = vld [vmem:[%s600 + $0x4] sm:$0xf]
        %v603 = vld [vmem:[%s600 + $0x8] sm:$0xf]
        %v604 = vld [vmem:[%s600 + $0xc] sm:$0xf]
        %v605 = vld [vmem:[%s600 + $0x10] sm:$0xf]
        %v606 = vld [vmem:[%s600 + $0x14] sm:$0xf]
        %v607 = vunpack.c.l.bf16 %v601
        %v608 = vunpack.c.l.bf16 %v602
        %v609 = vunpack.c.l.bf16 %v603
        %v610 = vunpack.c.l.bf16 %v604
        %v611 = vunpack.c.l.bf16 %v605
        %v612 = vunpack.c.l.bf16 %v606
        %v613 = vmul.f32 %v607, %v563
        %v614 = vmul.f32 %v608, %v564
        %v615 = vmul.f32 %v609, %v565
        %v616 = vmul.f32 %v610, %v566
        %v617 = vmul.f32 %v611, %v567
        %v618 = vmul.f32 %v612, %v568
        %v619 = vadd.f32 %v544, %v613
        %v620 = vadd.f32 %v545, %v614
        %v621 = vadd.f32 %v546, %v615
        %v622 = vadd.f32 %v547, %v616
        %v623 = vadd.f32 %v548, %v617
        %v624 = vadd.f32 %v549, %v618
        %v625 = vmul.f32 %v569, 0.125
        %v626 = vmul.f32 %v570, 0.125
        %v627 = vmul.f32 %v571, 0.125
        %v628 = vmul.f32 %v572, 0.125
        %v629 = vmul.f32 %v573, 0.125
        %v630 = vmul.f32 %v574, 0.125
        %v631 = vmul.f32 %v594, 0.125
        %v632 = vmul.f32 %v595, 0.125
        %v633 = vmul.f32 %v596, 0.125
        %v634 = vmul.f32 %v597, 0.125
        %v635 = vmul.f32 %v598, 0.125
        %v636 = vmul.f32 %v599, 0.125
        %v637 = vsub.f32 %v625, %v631
        %v638 = vsub.f32 %v626, %v632
        %v639 = vsub.f32 %v627, %v633
        %v640 = vsub.f32 %v628, %v634
        %v641 = vsub.f32 %v629, %v635
        %v642 = vsub.f32 %v630, %v636
        %643 = vst [vmem:[%s338] sm:$0xff] %v631
        %644 = vst [vmem:[%s338 + $0x8] sm:$0xff] %v632
        %645 = vst [vmem:[%s338 + $0x10] sm:$0xff] %v633
        %646 = vst [vmem:[%s338 + $0x18] sm:$0xff] %v634
        %647 = vst [vmem:[%s338 + $0x20] sm:$0xff] %v635
        %648 = vst [vmem:[%s338 + $0x28] sm:$0xff] %v636
        %s649 = scalar_lea.vmem %s338, 48 [#allocation10]
        %650 = vst [vmem:[%s649] sm:$0xff] %v637
        %651 = vst [vmem:[%s649 + $0x8] sm:$0xff] %v638
        %652 = vst [vmem:[%s649 + $0x10] sm:$0xff] %v639
        %653 = vst [vmem:[%s649 + $0x18] sm:$0xff] %v640
        %654 = vst [vmem:[%s649 + $0x20] sm:$0xff] %v641
        %655 = vst [vmem:[%s649 + $0x28] sm:$0xff] %v642
        %v656 = vld [vmem:[%s302] sm:$0xff]
        %v657 = vld [vmem:[%s302 + $0x8] sm:$0xff]
        %v658 = vld [vmem:[%s302 + $0x10] sm:$0xff]
        %v659 = vld [vmem:[%s302 + $0x18] sm:$0xff]
        %v660 = vld [vmem:[%s302 + $0x20] sm:$0xff]
        %v661 = vld [vmem:[%s302 + $0x28] sm:$0xff]
        %v662 = vstv %s344
        %v663 = vmul.f32 %v662, %v656
        %v664 = vmul.f32 %v662, %v657
        %v665 = vmul.f32 %v662, %v658
        %v666 = vmul.f32 %v662, %v659
        %v667 = vmul.f32 %v662, %v660
        %v668 = vmul.f32 %v662, %v661
        %v669 = vadd.f32 %v631, %v663
        %v670 = vadd.f32 %v632, %v664
        %v671 = vadd.f32 %v633, %v665
        %v672 = vadd.f32 %v634, %v666
        %v673 = vadd.f32 %v635, %v667
        %v674 = vadd.f32 %v636, %v668
        %675 = vst [vmem:[%s331] sm:$0xff] %v669
        %676 = vst [vmem:[%s331 + $0x8] sm:$0xff] %v670
        %677 = vst [vmem:[%s331 + $0x10] sm:$0xff] %v671
        %678 = vst [vmem:[%s331 + $0x18] sm:$0xff] %v672
        %679 = vst [vmem:[%s331 + $0x20] sm:$0xff] %v673
        %680 = vst [vmem:[%s331 + $0x28] sm:$0xff] %v674
        %s681 = scalar_lea.vmem %s302, 48 [#allocation8]
        %v682 = vld [vmem:[%s681] sm:$0xff]
        %v683 = vld [vmem:[%s681 + $0x8] sm:$0xff]
        %v684 = vld [vmem:[%s681 + $0x10] sm:$0xff]
        %v685 = vld [vmem:[%s681 + $0x18] sm:$0xff]
        %v686 = vld [vmem:[%s681 + $0x20] sm:$0xff]
        %v687 = vld [vmem:[%s681 + $0x28] sm:$0xff]
        %v688 = vmul.f32 %v662, %v682
        %v689 = vmul.f32 %v662, %v683
        %v690 = vmul.f32 %v662, %v684
        %v691 = vmul.f32 %v662, %v685
        %v692 = vmul.f32 %v662, %v686
        %v693 = vmul.f32 %v662, %v687
        %v694 = vadd.f32 %v637, %v688
        %v695 = vadd.f32 %v638, %v689
        %v696 = vadd.f32 %v639, %v690
        %v697 = vadd.f32 %v640, %v691
        %v698 = vadd.f32 %v641, %v692
        %v699 = vadd.f32 %v642, %v693
        %s700 = scalar_lea.vmem %s331, 48 [#allocation9]
        %701 = vst [vmem:[%s700] sm:$0xff] %v694
        %702 = vst [vmem:[%s700 + $0x8] sm:$0xff] %v695
        %703 = vst [vmem:[%s700 + $0x10] sm:$0xff] %v696
        %704 = vst [vmem:[%s700 + $0x18] sm:$0xff] %v697
        %705 = vst [vmem:[%s700 + $0x20] sm:$0xff] %v698
        %706 = vst [vmem:[%s700 + $0x28] sm:$0xff] %v699
        %v707 = vmul.f32 %v619, 0.125
        %v708 = vmul.f32 %v620, 0.125
        %v709 = vmul.f32 %v621, 0.125
        %v710 = vmul.f32 %v622, 0.125
        %v711 = vmul.f32 %v623, 0.125
        %v712 = vmul.f32 %v624, 0.125
        %v713 = vsub.f32 %v625, %v707
        %v714 = vsub.f32 %v626, %v708
        %v715 = vsub.f32 %v627, %v709
        %v716 = vsub.f32 %v628, %v710
        %v717 = vsub.f32 %v629, %v711
        %v718 = vsub.f32 %v630, %v712
        %s719 = scalar_lea.vmem %s338, 96 [#allocation10]
        %720 = vst [vmem:[%s719] sm:$0xff] %v707
        %721 = vst [vmem:[%s719 + $0x8] sm:$0xff] %v708
        %722 = vst [vmem:[%s719 + $0x10] sm:$0xff] %v709
        %723 = vst [vmem:[%s719 + $0x18] sm:$0xff] %v710
        %724 = vst [vmem:[%s719 + $0x20] sm:$0xff] %v711
        %725 = vst [vmem:[%s719 + $0x28] sm:$0xff] %v712
        %s726 = scalar_lea.vmem %s338, 144 [#allocation10]
        %727 = vst [vmem:[%s726] sm:$0xff] %v713
        %728 = vst [vmem:[%s726 + $0x8] sm:$0xff] %v714
        %729 = vst [vmem:[%s726 + $0x10] sm:$0xff] %v715
        %730 = vst [vmem:[%s726 + $0x18] sm:$0xff] %v716
        %731 = vst [vmem:[%s726 + $0x20] sm:$0xff] %v717
        %732 = vst [vmem:[%s726 + $0x28] sm:$0xff] %v718
        %s733 = scalar_lea.vmem %s302, 96 [#allocation8]
        %v734 = vld [vmem:[%s733] sm:$0xff]
        %v735 = vld [vmem:[%s733 + $0x8] sm:$0xff]
        %v736 = vld [vmem:[%s733 + $0x10] sm:$0xff]
        %v737 = vld [vmem:[%s733 + $0x18] sm:$0xff]
        %v738 = vld [vmem:[%s733 + $0x20] sm:$0xff]
        %v739 = vld [vmem:[%s733 + $0x28] sm:$0xff]
        %v740 = vmul.f32 %v662, %v734
        %v741 = vmul.f32 %v662, %v735
        %v742 = vmul.f32 %v662, %v736
        %v743 = vmul.f32 %v662, %v737
        %v744 = vmul.f32 %v662, %v738
        %v745 = vmul.f32 %v662, %v739
        %v746 = vadd.f32 %v707, %v740
        %v747 = vadd.f32 %v708, %v741
        %v748 = vadd.f32 %v709, %v742
        %v749 = vadd.f32 %v710, %v743
        %v750 = vadd.f32 %v711, %v744
        %v751 = vadd.f32 %v712, %v745
        %s752 = scalar_lea.vmem %s331, 96 [#allocation9]
        %753 = vst [vmem:[%s752] sm:$0xff] %v746
        %754 = vst [vmem:[%s752 + $0x8] sm:$0xff] %v747
        %755 = vst [vmem:[%s752 + $0x10] sm:$0xff] %v748
        %756 = vst [vmem:[%s752 + $0x18] sm:$0xff] %v749
        %757 = vst [vmem:[%s752 + $0x20] sm:$0xff] %v750
        %758 = vst [vmem:[%s752 + $0x28] sm:$0xff] %v751
        %s759 = scalar_lea.vmem %s302, 144 [#allocation8]
        %v760 = vld [vmem:[%s759] sm:$0xff]
        %v761 = vld [vmem:[%s759 + $0x8] sm:$0xff]
        %v762 = vld [vmem:[%s759 + $0x10] sm:$0xff]
        %v763 = vld [vmem:[%s759 + $0x18] sm:$0xff]
        %v764 = vld [vmem:[%s759 + $0x20] sm:$0xff]
        %v765 = vld [vmem:[%s759 + $0x28] sm:$0xff]
        %v766 = vmul.f32 %v662, %v760
        %v767 = vmul.f32 %v662, %v761
        %v768 = vmul.f32 %v662, %v762
        %v769 = vmul.f32 %v662, %v763
        %v770 = vmul.f32 %v662, %v764
        %v771 = vmul.f32 %v662, %v765
        %v772 = vadd.f32 %v713, %v766
        %v773 = vadd.f32 %v714, %v767
        %v774 = vadd.f32 %v715, %v768
        %v775 = vadd.f32 %v716, %v769
        %v776 = vadd.f32 %v717, %v770
        %v777 = vadd.f32 %v718, %v771
        %s778 = scalar_lea.vmem %s331, 144 [#allocation9]
        %779 = vst [vmem:[%s778] sm:$0xff] %v772
        %780 = vst [vmem:[%s778 + $0x8] sm:$0xff] %v773
        %781 = vst [vmem:[%s778 + $0x10] sm:$0xff] %v774
        %782 = vst [vmem:[%s778 + $0x18] sm:$0xff] %v775
        %783 = vst [vmem:[%s778 + $0x20] sm:$0xff] %v776
        %784 = vst [vmem:[%s778 + $0x28] sm:$0xff] %v777
        %s785 = sand.u32 %s153, 1
        %s786 = scalar_lea.sflag [#allocation5], %s785
        %s787 = sand.u32 %s153, 1
        %s788 = smul.addr %s787, 192
        %s789 = scalar_lea.vmem [#allocation9], %s788
        %s790 = sand.u32 %s181, 1
        %s791 = scalar_lea.sflag [#allocation11], %s790
        %s792 = sand.u32 %s181, 1
        %s793 = smul.addr %s792, 192
        %s794 = scalar_lea.vmem [#allocation10], %s793
        // Predicated region
        $region49: #{tpu_custom_call.1} parent=35 // pred_check
          %p795 = pneg %p163
        $region50: #{tpu_custom_call.1} parent=35 // pred_check_branch
          %797 = sbr.rel (%p795) target = $region52
        $region51: #{tpu_custom_call.1} parent=35 // pred_region
          %s798 = smul.u32 2, %s32
          %s800 = ssub.s32 3072, 3072
          %801 = vsyncadd %s786, %s800
          %s802 = smul.addr %s33, 24
          %s803 = sadd.s32 %s798, %s802
          %s804 = smul.addr %s803, 128
          %s805 = scalar_lea.hbm %s4, %s804
          %s806 = sshll.u32 %s789, 4
          %s807 = int_to_ptr.vmem [resolvable:$true] %s806
          %812 = dma.vmem_to_hbm [thread:$0]  %s807, 3072, %s805, %s786, 128, 128, 8
        $region52: #{tpu_custom_call.1} parent=35 // pred_fallthru
          _
        // Predicated region
        $region53: #{tpu_custom_call.1} parent=35 // pred_check
          %p813 = pneg %p191
        $region54: #{tpu_custom_call.1} parent=35 // pred_check_branch
          %815 = sbr.rel (%p813) target = $region56
        $region55: #{tpu_custom_call.1} parent=35 // pred_region
          %s816 = smul.u32 2, %s32
          %s818 = ssub.s32 3072, 3072
          %819 = vsyncadd %s791, %s818
          %s820 = smul.addr %s33, 24
          %s821 = sadd.s32 %s816, %s820
          %s822 = smul.addr %s821, 128
          %s823 = scalar_lea.hbm %s5, %s822
          %s824 = sshll.u32 %s794, 4
          %s825 = int_to_ptr.vmem [resolvable:$true] %s824
          %830 = dma.vmem_to_hbm [thread:$0]  %s825, 3072, %s823, %s791, 128, 128, 8
        $region56: #{tpu_custom_call.1} parent=35 // pred_fallthru
          _
      $region36: #{tpu_custom_call.1} parent=5 // pred_fallthru
        _
      %p831 = scmp.le.s32.totalorder 2, %s23
      // Predicated region
      $region57: #{tpu_custom_call.1} parent=5 // pred_check
        %p832 = pneg %p831
      $region58: #{tpu_custom_call.1} parent=5 // pred_check_branch
        %834 = sbr.rel (%p832) target = $region60
      $region59: #{tpu_custom_call.1} parent=5 // pred_region
        %s835 = ssub.s32 %s23, 2
        // Predicated region
        $region61: #{tpu_custom_call.1} parent=59 // pred_check
          %p836 = pneg %p169
        $region62: #{tpu_custom_call.1} parent=59 // pred_check_branch
          %838 = sbr.rel (%p836) target = $region64
        $region63: #{tpu_custom_call.1} parent=59 // pred_region
          %s839 = sand.u32 %s154, 1
          %s840 = scalar_lea.sflag [#allocation5], %s839
          %s841 = sand.u32 %s154, 1
          %s842 = smul.addr %s841, 192
          %s843 = scalar_lea.vmem [#allocation9], %s842
          %844 = dma.done %s840, 3072
        $region64: #{tpu_custom_call.1} parent=59 // pred_fallthru
          _
        // Predicated region
        $region65: #{tpu_custom_call.1} parent=59 // pred_check
          %p845 = pneg %p197
        $region66: #{tpu_custom_call.1} parent=59 // pred_check_branch
          %847 = sbr.rel (%p845) target = $region68
        $region67: #{tpu_custom_call.1} parent=59 // pred_region
          %s848 = sand.u32 %s182, 1
          %s849 = scalar_lea.sflag [#allocation11], %s848
          %s850 = sand.u32 %s182, 1
          %s851 = smul.addr %s850, 192
          %s852 = scalar_lea.vmem [#allocation10], %s851
          %853 = dma.done %s849, 3072
        $region68: #{tpu_custom_call.1} parent=59 // pred_fallthru
          _
      $region60: #{tpu_custom_call.1} parent=5 // pred_fallthru
        _
    $region6: #{tpu_custom_call.1} parent=1 // loop_footer
      %s27 = sadd.s32 1, %s23
    $region7: #{tpu_custom_call.1} parent=1 // loop_footer_branch
      %22 = sbr.rel target = $region3
    $region8: #{tpu_custom_call.1} parent=1 // loop_exit
      _
    %854 = vsyncpa [#allocation4], 1
    %s855 = scalar_lea.sflag [#allocation4], 1
    %856 = vsyncpa %s855, 1
    %857 = vsyncpa [#allocation7], 1
    %858 = vsyncpa [#allocation5], 1
    %s859 = scalar_lea.sflag [#allocation5], 1
    %860 = vsyncpa %s859, 1
    %861 = vsyncpa [#allocation11], 1
    %s862 = scalar_lea.sflag [#allocation11], 1
    %863 = vsyncpa %s862, 1

</llo_original>
